<compile_context>
chip_gen: v7x
topology: tpu7x:2x2x1
jax: 0.10.0
libtpu: 0.0.40
codegen_flags: <defaults>
</compile_context>

<pallas_src>
import math

import jax
import jax.numpy as jnp
from jax.experimental import pallas as pl
from jax.experimental.pallas import tpu as pltpu

# ---------------------------------------------------------------------------
# Model hyper-parameters (small, consistent with the module's forward)
# ---------------------------------------------------------------------------
B = 2          # batch_size
S = 8          # seq_len
D = 32         # d_model
F = 64         # ffn_depth
H = 4          # n_heads
DH = D // H    # per-head depth
BS = B * S     # flattened tokens
LN_EPS = 1e-5  # PyTorch nn.LayerNorm default


# ---------------------------------------------------------------------------
# Kernel: no grid, whole layer resident in VMEM, batch flattened to (B*S, D)
# ---------------------------------------------------------------------------
def encoder_layer_kernel(
    x_ref,          # (BS, D)        f32
    mask_ref,       # (H*BS, BS)     f32 additive mask, stacked-heads layout
    hq_ref,         # (H, 1, D)      f32 per-head q column mask, scale folded
    ho_ref,         # (H, 1, D)      f32 per-head output column mask
    wqkv_ref,       # (D, 3D)        bf16 concatenated Wq|Wk|Wv
    bqkv_ref,       # (1, 3D)        f32  concatenated bq|bk|bv
    wo_ref, bo_ref,       # (D, D) bf16, (1, D) f32
    g1_ref, be1_ref,      # (1, D) f32 LayerNorm 1
    w1_ref, b1_ref,       # (D, F) bf16, (1, F) f32
    w2_ref, b2_ref,       # (F, D) bf16, (1, D) f32
    g2_ref, be2_ref,      # (1, D) f32 LayerNorm 2
    out_ref,        # (BS, D) f32
):
    f32 = jnp.float32
    bf16 = jnp.bfloat16

    xf = x_ref[...]                       # f32 copy kept for residual / LN
    xb = xf.astype(bf16)                  # bf16 operand for the MXU

    # ---- fused QKV projection: one MXU pass for the whole batch ------------
    qkv = jnp.dot(xb, wqkv_ref[...], preferred_element_type=f32) + bqkv_ref[...]
    q = qkv[:, :D]                        # static lane slices (cheap)
    k = qkv[:, D:2 * D]
    v = qkv[:, 2 * D:]

    # ---- stacked-heads self-attention ---------------------------------------
    # Rows h*BS:(h+1)*BS of `qm` hold q with only head-h columns kept (and the
    # 1/sqrt(DH) scale folded in), so one (64,32)x(32,16) matmul produces all
    # heads' scores at once; k's transpose is folded into the contraction.
    qm = (q[None, :, :] * hq_ref[...]).reshape(H * BS, D).astype(bf16)
    s = jax.lax.dot_general(
        qm, k.astype(bf16),
        dimension_numbers=(((1,), (1,)), ((), ())),
        preferred_element_type=f32,
    )                                     # (H*BS, BS)
    s = s + mask_ref[...]                 # additive mask, already stacked

    m = jnp.max(s, axis=-1, keepdims=True)
    e = jnp.exp(s - m)
    p = e * pl.reciprocal(jnp.sum(e, axis=-1, keepdims=True), approx=True)

    # One PV matmul for all heads; then keep head-h columns of head-h rows and
    # sum over heads (small VPU reduce over the leading axis).
    ctx = jnp.dot(p.astype(bf16), v.astype(bf16),
                  preferred_element_type=f32)               # (H*BS, D)
    ctx = jnp.sum(ctx.reshape(H, BS, D) * ho_ref[...], axis=0)   # (BS, D)

    attn = jnp.dot(ctx.astype(bf16), wo_ref[...],
                   preferred_element_type=f32) + bo_ref[...]

    # ---- residual + LayerNorm 1 (f32 VPU math) ------------------------------
    h1 = attn + xf
    mu1 = jnp.mean(h1, axis=-1, keepdims=True)
    c1 = h1 - mu1
    var1 = jnp.mean(c1 * c1, axis=-1, keepdims=True)
    h1n = c1 * jax.lax.rsqrt(var1 + LN_EPS) * g1_ref[...] + be1_ref[...]

    # ---- position-wise feed-forward (bf16 operands, f32 accumulation) -------
    f = jnp.dot(h1n.astype(bf16), w1_ref[...],
                preferred_element_type=f32) + b1_ref[...]
    f = jnp.maximum(f, 0.0)               # ReLU
    f = jnp.dot(f.astype(bf16), w2_ref[...],
                preferred_element_type=f32) + b2_ref[...]

    # ---- residual + LayerNorm 2 ---------------------------------------------
    h2 = f + h1n
    mu2 = jnp.mean(h2, axis=-1, keepdims=True)
    c2 = h2 - mu2
    var2 = jnp.mean(c2 * c2, axis=-1, keepdims=True)
    h2n = c2 * jax.lax.rsqrt(var2 + LN_EPS) * g2_ref[...] + be2_ref[...]

    out_ref[...] = h2n.astype(out_ref.dtype)


# ---------------------------------------------------------------------------
# One-time parameter preparation (hoisted out of the per-call hot path)
# ---------------------------------------------------------------------------
def prepare_params(params):
    (wq, bq, wk, bk, wv, bv, wo, bo,
     g1, be1, w1, b1, w2, b2, g2, be2) = params
    bf16, f32 = jnp.bfloat16, jnp.float32

    wqkv = jnp.concatenate([wq, wk, wv], axis=1).astype(bf16)   # (D, 3D)
    bqkv = jnp.concatenate([bq, bk, bv], axis=1).astype(f32)    # (1, 3D)

    # per-head column masks (H, 1, D): 1 on head-h feature columns, else 0
    head_of_col = jnp.arange(D) // DH
    hmask = (head_of_col[None, :] == jnp.arange(H)[:, None]).astype(f32)
    hmask = hmask[:, None, :]                                   # (H, 1, D)
    hq = hmask * (1.0 / math.sqrt(DH))                          # scale folded
    ho = hmask

    return (hq, ho, wqkv, bqkv,
            wo.astype(bf16), bo.astype(f32),
            g1.astype(f32), be1.astype(f32),
            w1.astype(bf16), b1.astype(f32),
            w2.astype(bf16), b2.astype(f32),
            g2.astype(f32), be2.astype(f32))


# ---------------------------------------------------------------------------
# Per-call wrapper
# ---------------------------------------------------------------------------
@jax.jit
def encoder_layer(x, src_mask, prepared):
    """x: (B, S, D) f32, src_mask: (B, S, S) (1 keep / 0 mask)."""
    (hq, ho, wqkv, bqkv, wo, bo,
     g1, be1, w1, b1, w2, b2, g2, be2) = prepared

    xf = x.reshape(BS, D).astype(jnp.float32)

    # Additive attention mask over flattened tokens (per-call, src_mask data):
    #   0 where (same batch and src_mask==1), -1e9 elsewhere; emitted directly
    #   in the stacked-heads (H*BS, BS) layout the kernel consumes.
    km = src_mask.reshape(BS, S).astype(jnp.float32)
    keep = jnp.tile(km, (1, B))                                 # col j -> j % S
    rb = jnp.arange(BS, dtype=jnp.int32)[:, None] // S
    cb = jnp.arange(BS, dtype=jnp.int32)[None, :] // S
    mask_add = jnp.where((rb == cb) & (keep > 0), 0.0, -1e9).astype(jnp.float32)
    mask_add = jnp.tile(mask_add, (H, 1))                       # (H*BS, BS)

    inputs = (xf, mask_add, hq, ho, wqkv, bqkv, wo, bo,
              g1, be1, w1, b1, w2, b2, g2, be2)

    out = pl.pallas_call(
        encoder_layer_kernel,
        out_shape=jax.ShapeDtypeStruct((BS, D), jnp.float32),
        in_specs=[pl.BlockSpec(memory_space=pltpu.MemorySpace.VMEM)
                  for _ in inputs],
        out_specs=pl.BlockSpec(memory_space=pltpu.MemorySpace.VMEM),
    )(*inputs)

    return out.reshape(B, S, D)


# ---------------------------------------------------------------------------
# Pure-JAX f32 reference (for a correctness check)
# ---------------------------------------------------------------------------
def encoder_layer_ref(x, mask, params):
    (wq, bq, wk, bk, wv, bv, wo, bo,
     g1, be1, w1, b1, w2, b2, g2, be2) = params

    def ln(h, g, beta):
        mu = h.mean(-1, keepdims=True)
        var = ((h - mu) ** 2).mean(-1, keepdims=True)
        return (h - mu) / jnp.sqrt(var + LN_EPS) * g + beta

    q = x @ wq + bq
    k = x @ wk + bk
    v = x @ wv + bv
    qh = q.reshape(B, S, H, DH).transpose(0, 2, 1, 3)
    kh = k.reshape(B, S, H, DH).transpose(0, 2, 1, 3)
    vh = v.reshape(B, S, H, DH).transpose(0, 2, 1, 3)
    sc = jnp.einsum("bhqd,bhkd->bhqk", qh, kh) / math.sqrt(DH)
    sc = jnp.where(mask[:, None, :, :] > 0, sc, -1e9)
    p = jax.nn.softmax(sc, axis=-1)
    o = jnp.einsum("bhqk,bhkd->bhqd", p, vh).transpose(0, 2, 1, 3).reshape(B, S, D)
    o = o @ wo + bo
    h1 = ln(o + x, g1[0], be1[0])
    f = jnp.maximum(h1 @ w1 + b1, 0.0) @ w2 + b2
    return ln(f + h1, g2[0], be2[0])


# ---------------------------------------------------------------------------
# Main
# ---------------------------------------------------------------------------
if __name__ == "__main__":
    key = jax.random.PRNGKey(0)
    ks = jax.random.split(key, 20)

    def rnd(k, shape, scale=0.1):
        return jax.random.normal(k, shape, dtype=jnp.float32) * scale

    params = (
        rnd(ks[0], (D, D)), rnd(ks[1], (1, D)),      # Wq, bq
        rnd(ks[2], (D, D)), rnd(ks[3], (1, D)),      # Wk, bk
        rnd(ks[4], (D, D)), rnd(ks[5], (1, D)),      # Wv, bv
        rnd(ks[6], (D, D)), rnd(ks[7], (1, D)),      # Wo, bo
        jnp.ones((1, D), jnp.float32), jnp.zeros((1, D), jnp.float32),  # LN1
        rnd(ks[8], (D, F)), rnd(ks[9], (1, F)),      # FFN W1, b1
        rnd(ks[10], (F, D)), rnd(ks[11], (1, D)),    # FFN W2, b2
        jnp.ones((1, D), jnp.float32), jnp.zeros((1, D), jnp.float32),  # LN2
    )

    x = jax.random.normal(ks[12], (B, S, D), dtype=jnp.float32)
    # padding mask: last 2 key positions of batch element 1 are masked out
    mask = jnp.ones((B, S, S), dtype=jnp.float32)
    mask = mask.at[1, :, S - 2:].set(0.0)

    prepared = prepare_params(params)        # one-time weight formatting

    out = encoder_layer(x, mask, prepared)
    out = jax.block_until_ready(out)

    ref = encoder_layer_ref(x, mask, params)
    assert out.shape == (B, S, D)
    # tolerance loosened vs. the f32 reference: bf16 matmul operands and the
    # approximate EUP reciprocal in the softmax denominator.
    assert jnp.allclose(out, ref, atol=2e-2, rtol=2e-2), "mismatch vs reference"

    print("KERNEL_OK")
</pallas_src>

<mosaic_0001>
module attributes {stable_mosaic.version = 11 : i64} {
  func.func @encoder_layer_kernel(%arg0: memref<16x32xf32, #tpu.memory_space<vmem>>, %arg1: memref<64x16xf32, #tpu.memory_space<vmem>>, %arg2: memref<4x1x32xf32, #tpu.memory_space<vmem>>, %arg3: memref<4x1x32xf32, #tpu.memory_space<vmem>>, %arg4: memref<32x96xbf16, #tpu.memory_space<vmem>>, %arg5: memref<1x96xf32, #tpu.memory_space<vmem>>, %arg6: memref<32x32xbf16, #tpu.memory_space<vmem>>, %arg7: memref<1x32xf32, #tpu.memory_space<vmem>>, %arg8: memref<1x32xf32, #tpu.memory_space<vmem>>, %arg9: memref<1x32xf32, #tpu.memory_space<vmem>>, %arg10: memref<32x64xbf16, #tpu.memory_space<vmem>>, %arg11: memref<1x64xf32, #tpu.memory_space<vmem>>, %arg12: memref<64x32xbf16, #tpu.memory_space<vmem>>, %arg13: memref<1x32xf32, #tpu.memory_space<vmem>>, %arg14: memref<1x32xf32, #tpu.memory_space<vmem>>, %arg15: memref<1x32xf32, #tpu.memory_space<vmem>>, %arg16: memref<16x32xf32, #tpu.memory_space<vmem>>) attributes {dimension_semantics = [], scalar_prefetch = 0 : i64, scratch_operands = 0 : i64, tpu.core_type = #tpu.core_type<tc>} {
    %c0 = arith.constant 0 : index
    %c0_0 = arith.constant 0 : index
    %0 = vector.load %arg0[%c0, %c0_0] : memref<16x32xf32, #tpu.memory_space<vmem>>, vector<16x32xf32>
    %1 = arith.truncf %0 : vector<16x32xf32> to vector<16x32xbf16>
    %c0_1 = arith.constant 0 : index
    %c0_2 = arith.constant 0 : index
    %2 = vector.load %arg4[%c0_1, %c0_2] : memref<32x96xbf16, #tpu.memory_space<vmem>>, vector<32x96xbf16>
    %cst = arith.constant dense<0.000000e+00> : vector<16x96xf32>
    %3 = tpu.matmul %1, %2, %cst {dimension_numbers = #tpu.dot_dimension_numbers<[1], [0], [0], [1], [0, 0, 1, 1], [], []>} : vector<16x32xbf16>, vector<32x96xbf16>, vector<16x96xf32> -> vector<16x96xf32>
    %c0_3 = arith.constant 0 : index
    %c0_4 = arith.constant 0 : index
    %4 = vector.load %arg5[%c0_3, %c0_4] : memref<1x96xf32, #tpu.memory_space<vmem>>, vector<1x96xf32>
    %5 = vector.broadcast %4 : vector<1x96xf32> to vector<16x96xf32>
    %6 = arith.addf %3, %5 : vector<16x96xf32>
    %7 = vector.extract_strided_slice %6 {offsets = [0, 0], sizes = [16, 32], strides = [1, 1]} : vector<16x96xf32> to vector<16x32xf32>
    %8 = vector.extract_strided_slice %6 {offsets = [0, 32], sizes = [16, 32], strides = [1, 1]} : vector<16x96xf32> to vector<16x32xf32>
    %9 = vector.extract_strided_slice %6 {offsets = [0, 64], sizes = [16, 32], strides = [1, 1]} : vector<16x96xf32> to vector<16x32xf32>
    %10 = vector.shape_cast %7 : vector<16x32xf32> to vector<1x16x32xf32>
    %c0_5 = arith.constant 0 : index
    %c0_6 = arith.constant 0 : index
    %c0_7 = arith.constant 0 : index
    %11 = vector.load %arg2[%c0_5, %c0_6, %c0_7] : memref<4x1x32xf32, #tpu.memory_space<vmem>>, vector<4x1x32xf32>
    %12 = vector.broadcast %10 : vector<1x16x32xf32> to vector<4x16x32xf32>
    %13 = vector.broadcast %11 : vector<4x1x32xf32> to vector<4x16x32xf32>
    %14 = arith.mulf %12, %13 : vector<4x16x32xf32>
    %15 = vector.shape_cast %14 : vector<4x16x32xf32> to vector<64x32xf32>
    %16 = arith.truncf %15 : vector<64x32xf32> to vector<64x32xbf16>
    %17 = arith.truncf %8 : vector<16x32xf32> to vector<16x32xbf16>
    %cst_8 = arith.constant dense<0.000000e+00> : vector<64x16xf32>
    %18 = tpu.matmul %16, %17, %cst_8 {dimension_numbers = #tpu.dot_dimension_numbers<[1], [1], [0], [0], [0, 0, 1, 0], [], []>} : vector<64x32xbf16>, vector<16x32xbf16>, vector<64x16xf32> -> vector<64x16xf32>
    %c0_9 = arith.constant 0 : index
    %c0_10 = arith.constant 0 : index
    %19 = vector.load %arg1[%c0_9, %c0_10] : memref<64x16xf32, #tpu.memory_space<vmem>>, vector<64x16xf32>
    %20 = arith.addf %18, %19 : vector<64x16xf32>
    %cst_11 = arith.constant dense<0xFF800000> : vector<64xf32>
    %21 = vector.multi_reduction <maximumf>, %20, %cst_11 [1] : vector<64x16xf32> to vector<64xf32>
    %22 = vector.shape_cast %21 : vector<64xf32> to vector<64x1xf32>
    %23 = vector.broadcast %22 : vector<64x1xf32> to vector<64x16xf32>
    %24 = arith.subf %20, %23 : vector<64x16xf32>
    %25 = math.exp %24 : vector<64x16xf32>
    %cst_12 = arith.constant dense<0.000000e+00> : vector<64xf32>
    %26 = vector.multi_reduction <add>, %25, %cst_12 [1] : vector<64x16xf32> to vector<64xf32>
    %27 = vector.shape_cast %26 : vector<64xf32> to vector<64x1xf32>
    %28 = tpu.reciprocal %27 {approx = true} : vector<64x1xf32> -> vector<64x1xf32>
    %29 = vector.broadcast %28 : vector<64x1xf32> to vector<64x16xf32>
    %30 = arith.mulf %25, %29 : vector<64x16xf32>
    %31 = arith.truncf %30 : vector<64x16xf32> to vector<64x16xbf16>
    %32 = arith.truncf %9 : vector<16x32xf32> to vector<16x32xbf16>
    %cst_13 = arith.constant dense<0.000000e+00> : vector<64x32xf32>
    %33 = tpu.matmul %31, %32, %cst_13 {dimension_numbers = #tpu.dot_dimension_numbers<[1], [0], [0], [1], [0, 0, 1, 1], [], []>} : vector<64x16xbf16>, vector<16x32xbf16>, vector<64x32xf32> -> vector<64x32xf32>
    %34 = vector.shape_cast %33 : vector<64x32xf32> to vector<4x16x32xf32>
    %c0_14 = arith.constant 0 : index
    %c0_15 = arith.constant 0 : index
    %c0_16 = arith.constant 0 : index
    %35 = vector.load %arg3[%c0_14, %c0_15, %c0_16] : memref<4x1x32xf32, #tpu.memory_space<vmem>>, vector<4x1x32xf32>
    %36 = vector.broadcast %35 : vector<4x1x32xf32> to vector<4x16x32xf32>
    %37 = arith.mulf %34, %36 : vector<4x16x32xf32>
    %cst_17 = arith.constant dense<0.000000e+00> : vector<16x32xf32>
    %38 = vector.multi_reduction <add>, %37, %cst_17 [0] : vector<4x16x32xf32> to vector<16x32xf32>
    %39 = arith.truncf %38 : vector<16x32xf32> to vector<16x32xbf16>
    %c0_18 = arith.constant 0 : index
    %c0_19 = arith.constant 0 : index
    %40 = vector.load %arg6[%c0_18, %c0_19] : memref<32x32xbf16, #tpu.memory_space<vmem>>, vector<32x32xbf16>
    %cst_20 = arith.constant dense<0.000000e+00> : vector<16x32xf32>
    %41 = tpu.matmul %39, %40, %cst_20 {dimension_numbers = #tpu.dot_dimension_numbers<[1], [0], [0], [1], [0, 0, 1, 1], [], []>} : vector<16x32xbf16>, vector<32x32xbf16>, vector<16x32xf32> -> vector<16x32xf32>
    %c0_21 = arith.constant 0 : index
    %c0_22 = arith.constant 0 : index
    %42 = vector.load %arg7[%c0_21, %c0_22] : memref<1x32xf32, #tpu.memory_space<vmem>>, vector<1x32xf32>
    %43 = vector.broadcast %42 : vector<1x32xf32> to vector<16x32xf32>
    %44 = arith.addf %41, %43 : vector<16x32xf32>
    %45 = arith.addf %44, %0 : vector<16x32xf32>
    %cst_23 = arith.constant dense<0.000000e+00> : vector<16xf32>
    %46 = vector.multi_reduction <add>, %45, %cst_23 [1] : vector<16x32xf32> to vector<16xf32>
    %47 = vector.shape_cast %46 : vector<16xf32> to vector<16x1xf32>
    %cst_24 = arith.constant 3.200000e+01 : f32
    %48 = vector.broadcast %cst_24 : f32 to vector<16x1xf32>
    %49 = arith.divf %47, %48 : vector<16x1xf32>
    %50 = vector.broadcast %49 : vector<16x1xf32> to vector<16x32xf32>
    %51 = arith.subf %45, %50 : vector<16x32xf32>
    %52 = arith.mulf %51, %51 : vector<16x32xf32>
    %cst_25 = arith.constant dense<0.000000e+00> : vector<16xf32>
    %53 = vector.multi_reduction <add>, %52, %cst_25 [1] : vector<16x32xf32> to vector<16xf32>
    %54 = vector.shape_cast %53 : vector<16xf32> to vector<16x1xf32>
    %cst_26 = arith.constant 3.200000e+01 : f32
    %55 = vector.broadcast %cst_26 : f32 to vector<16x1xf32>
    %56 = arith.divf %54, %55 : vector<16x1xf32>
    %cst_27 = arith.constant 9.99999974E-6 : f32
    %57 = vector.broadcast %cst_27 : f32 to vector<16x1xf32>
    %58 = arith.addf %56, %57 : vector<16x1xf32>
    %59 = math.rsqrt %58 : vector<16x1xf32>
    %60 = vector.broadcast %59 : vector<16x1xf32> to vector<16x32xf32>
    %61 = arith.mulf %51, %60 : vector<16x32xf32>
    %c0_28 = arith.constant 0 : index
    %c0_29 = arith.constant 0 : index
    %62 = vector.load %arg8[%c0_28, %c0_29] : memref<1x32xf32, #tpu.memory_space<vmem>>, vector<1x32xf32>
    %63 = vector.broadcast %62 : vector<1x32xf32> to vector<16x32xf32>
    %64 = arith.mulf %61, %63 : vector<16x32xf32>
    %c0_30 = arith.constant 0 : index
    %c0_31 = arith.constant 0 : index
    %65 = vector.load %arg9[%c0_30, %c0_31] : memref<1x32xf32, #tpu.memory_space<vmem>>, vector<1x32xf32>
    %66 = vector.broadcast %65 : vector<1x32xf32> to vector<16x32xf32>
    %67 = arith.addf %64, %66 : vector<16x32xf32>
    %68 = arith.truncf %67 : vector<16x32xf32> to vector<16x32xbf16>
    %c0_32 = arith.constant 0 : index
    %c0_33 = arith.constant 0 : index
    %69 = vector.load %arg10[%c0_32, %c0_33] : memref<32x64xbf16, #tpu.memory_space<vmem>>, vector<32x64xbf16>
    %cst_34 = arith.constant dense<0.000000e+00> : vector<16x64xf32>
    %70 = tpu.matmul %68, %69, %cst_34 {dimension_numbers = #tpu.dot_dimension_numbers<[1], [0], [0], [1], [0, 0, 1, 1], [], []>} : vector<16x32xbf16>, vector<32x64xbf16>, vector<16x64xf32> -> vector<16x64xf32>
    %c0_35 = arith.constant 0 : index
    %c0_36 = arith.constant 0 : index
    %71 = vector.load %arg11[%c0_35, %c0_36] : memref<1x64xf32, #tpu.memory_space<vmem>>, vector<1x64xf32>
    %72 = vector.broadcast %71 : vector<1x64xf32> to vector<16x64xf32>
    %73 = arith.addf %70, %72 : vector<16x64xf32>
    %cst_37 = arith.constant 0.000000e+00 : f32
    %74 = vector.broadcast %cst_37 : f32 to vector<16x64xf32>
    %75 = arith.maximumf %73, %74 : vector<16x64xf32>
    %76 = arith.truncf %75 : vector<16x64xf32> to vector<16x64xbf16>
    %c0_38 = arith.constant 0 : index
    %c0_39 = arith.constant 0 : index
    %77 = vector.load %arg12[%c0_38, %c0_39] : memref<64x32xbf16, #tpu.memory_space<vmem>>, vector<64x32xbf16>
    %cst_40 = arith.constant dense<0.000000e+00> : vector<16x32xf32>
    %78 = tpu.matmul %76, %77, %cst_40 {dimension_numbers = #tpu.dot_dimension_numbers<[1], [0], [0], [1], [0, 0, 1, 1], [], []>} : vector<16x64xbf16>, vector<64x32xbf16>, vector<16x32xf32> -> vector<16x32xf32>
    %c0_41 = arith.constant 0 : index
    %c0_42 = arith.constant 0 : index
    %79 = vector.load %arg13[%c0_41, %c0_42] : memref<1x32xf32, #tpu.memory_space<vmem>>, vector<1x32xf32>
    %80 = vector.broadcast %79 : vector<1x32xf32> to vector<16x32xf32>
    %81 = arith.addf %78, %80 : vector<16x32xf32>
    %82 = arith.addf %81, %67 : vector<16x32xf32>
    %cst_43 = arith.constant dense<0.000000e+00> : vector<16xf32>
    %83 = vector.multi_reduction <add>, %82, %cst_43 [1] : vector<16x32xf32> to vector<16xf32>
    %84 = vector.shape_cast %83 : vector<16xf32> to vector<16x1xf32>
    %cst_44 = arith.constant 3.200000e+01 : f32
    %85 = vector.broadcast %cst_44 : f32 to vector<16x1xf32>
    %86 = arith.divf %84, %85 : vector<16x1xf32>
    %87 = vector.broadcast %86 : vector<16x1xf32> to vector<16x32xf32>
    %88 = arith.subf %82, %87 : vector<16x32xf32>
    %89 = arith.mulf %88, %88 : vector<16x32xf32>
    %cst_45 = arith.constant dense<0.000000e+00> : vector<16xf32>
    %90 = vector.multi_reduction <add>, %89, %cst_45 [1] : vector<16x32xf32> to vector<16xf32>
    %91 = vector.shape_cast %90 : vector<16xf32> to vector<16x1xf32>
    %cst_46 = arith.constant 3.200000e+01 : f32
    %92 = vector.broadcast %cst_46 : f32 to vector<16x1xf32>
    %93 = arith.divf %91, %92 : vector<16x1xf32>
    %cst_47 = arith.constant 9.99999974E-6 : f32
    %94 = vector.broadcast %cst_47 : f32 to vector<16x1xf32>
    %95 = arith.addf %93, %94 : vector<16x1xf32>
    %96 = math.rsqrt %95 : vector<16x1xf32>
    %97 = vector.broadcast %96 : vector<16x1xf32> to vector<16x32xf32>
    %98 = arith.mulf %88, %97 : vector<16x32xf32>
    %c0_48 = arith.constant 0 : index
    %c0_49 = arith.constant 0 : index
    %99 = vector.load %arg14[%c0_48, %c0_49] : memref<1x32xf32, #tpu.memory_space<vmem>>, vector<1x32xf32>
    %100 = vector.broadcast %99 : vector<1x32xf32> to vector<16x32xf32>
    %101 = arith.mulf %98, %100 : vector<16x32xf32>
    %c0_50 = arith.constant 0 : index
    %c0_51 = arith.constant 0 : index
    %102 = vector.load %arg15[%c0_50, %c0_51] : memref<1x32xf32, #tpu.memory_space<vmem>>, vector<1x32xf32>
    %103 = vector.broadcast %102 : vector<1x32xf32> to vector<16x32xf32>
    %104 = arith.addf %101, %103 : vector<16x32xf32>
    %c0_52 = arith.constant 0 : index
    %c0_53 = arith.constant 0 : index
    %105 = vector.load %arg16[%c0_52, %c0_53] : memref<16x32xf32, #tpu.memory_space<vmem>>, vector<16x32xf32>
    tpu.vector_store %arg16[%c0_52, %c0_53], %104 {strides = array<i32>} : memref<16x32xf32, #tpu.memory_space<vmem>>, vector<16x32xf32>,
    return
  }
}

</mosaic_0001>

<llo_original>
// kernel: encoder_layer.1
$region0: #{encoder_layer.1}
  #allocation0 [shape = 'u32[]', space=smem, size = 0x4, offset = 0x4, fixed_abs, tag = 'smem constant byte address 0x4 - core index']
  #allocation1 [shape = 'u32[144,128]{1,0:T(1,128)}', space=vmem, size = 0x12000, scoped, tag = 'internal scratch']
  %s0 = inlined_call_operand.vmem [shape: f32[16,32], index: 0, kind: input, shape index: {}]
  %s1 = inlined_call_operand.vmem [shape: f32[64,16], index: 1, kind: input, shape index: {}]
  %s2 = inlined_call_operand.vmem [shape: f32[4,1,32], index: 2, kind: input, shape index: {}]
  %s3 = inlined_call_operand.vmem [shape: f32[4,1,32], index: 3, kind: input, shape index: {}]
  %s4 = inlined_call_operand.vmem [shape: bf16[32,96], index: 4, kind: input, shape index: {}]
  %s5 = inlined_call_operand.vmem [shape: f32[1,96], index: 5, kind: input, shape index: {}]
  %s6 = inlined_call_operand.vmem [shape: bf16[32,32], index: 6, kind: input, shape index: {}]
  %s7 = inlined_call_operand.vmem [shape: f32[1,32], index: 7, kind: input, shape index: {}]
  %s8 = inlined_call_operand.vmem [shape: f32[1,32], index: 8, kind: input, shape index: {}]
  %s9 = inlined_call_operand.vmem [shape: f32[1,32], index: 9, kind: input, shape index: {}]
  %s10 = inlined_call_operand.vmem [shape: bf16[32,64], index: 10, kind: input, shape index: {}]
  %s11 = inlined_call_operand.vmem [shape: f32[1,64], index: 11, kind: input, shape index: {}]
  %s12 = inlined_call_operand.vmem [shape: bf16[64,32], index: 12, kind: input, shape index: {}]
  %s13 = inlined_call_operand.vmem [shape: f32[1,32], index: 13, kind: input, shape index: {}]
  %s14 = inlined_call_operand.vmem [shape: f32[1,32], index: 14, kind: input, shape index: {}]
  %s15 = inlined_call_operand.vmem [shape: f32[1,32], index: 15, kind: input, shape index: {}]
  %s16 = inlined_call_operand.hbm [shape: f32[16,32], index: 16, kind: output, shape index: {}]
  %s17 = sld [smem:[#allocation0]]
  $region74: #{encoder_layer.1} parent=0
    _
  %s19 = ssub.s32 1, %s17
  %s20 = scalar_select 0, %s19, %s17
  $region1: #{encoder_layer.1} parent=0
    #allocation2 [shape = 'u8[8192]{0}', space=vmem, size = 0x2000, scoped, tag = 'output window, operand 0, single buffered']
    #allocation3 [shape = 's32[1]{0}', space=sflag, size = 0x4, scoped, tag = 'scoped memory for encoder_layer.1']
    %21 = vsyncpa [#allocation3], 0
    // Predicated region
    $region2: #{encoder_layer.1} parent=1 // pred_check
      _
    $region3: #{encoder_layer.1} parent=1 // pred_check_branch
      %23 = sbr.rel (0) target = $region5
    $region4: #{encoder_layer.1} parent=1 // pred_region
      _
    $region5: #{encoder_layer.1} parent=1 // pred_fallthru
      _
    // Predicated region
    $region6: #{encoder_layer.1} parent=1 // pred_check
      _
    $region7: #{encoder_layer.1} parent=1 // pred_check_branch
      %25 = sbr.rel (0) target = $region9
    $region8: #{encoder_layer.1} parent=1 // pred_region
      _
    $region9: #{encoder_layer.1} parent=1 // pred_fallthru
      _
    // Predicated region
    $region10: #{encoder_layer.1} parent=1 // pred_check
      _
    $region11: #{encoder_layer.1} parent=1 // pred_check_branch
      %27 = sbr.rel (0) target = $region13
    $region12: #{encoder_layer.1} parent=1 // pred_region
      _
    $region13: #{encoder_layer.1} parent=1 // pred_fallthru
      _
    // Predicated region
    $region14: #{encoder_layer.1} parent=1 // pred_check
      _
    $region15: #{encoder_layer.1} parent=1 // pred_check_branch
      %29 = sbr.rel (0) target = $region17
    $region16: #{encoder_layer.1} parent=1 // pred_region
      _
    $region17: #{encoder_layer.1} parent=1 // pred_fallthru
      _
    // Predicated region
    $region18: #{encoder_layer.1} parent=1 // pred_check
      _
    $region19: #{encoder_layer.1} parent=1 // pred_check_branch
      %31 = sbr.rel (0) target = $region21
    $region20: #{encoder_layer.1} parent=1 // pred_region
      _
    $region21: #{encoder_layer.1} parent=1 // pred_fallthru
      _
    // Predicated region
    $region22: #{encoder_layer.1} parent=1 // pred_check
      _
    $region23: #{encoder_layer.1} parent=1 // pred_check_branch
      %33 = sbr.rel (0) target = $region25
    $region24: #{encoder_layer.1} parent=1 // pred_region
      _
    $region25: #{encoder_layer.1} parent=1 // pred_fallthru
      _
    // Predicated region
    $region26: #{encoder_layer.1} parent=1 // pred_check
      _
    $region27: #{encoder_layer.1} parent=1 // pred_check_branch
      %35 = sbr.rel (0) target = $region29
    $region28: #{encoder_layer.1} parent=1 // pred_region
      _
    $region29: #{encoder_layer.1} parent=1 // pred_fallthru
      _
    // Predicated region
    $region30: #{encoder_layer.1} parent=1 // pred_check
      _
    $region31: #{encoder_layer.1} parent=1 // pred_check_branch
      %37 = sbr.rel (0) target = $region33
    $region32: #{encoder_layer.1} parent=1 // pred_region
      _
    $region33: #{encoder_layer.1} parent=1 // pred_fallthru
      _
    // Predicated region
    $region34: #{encoder_layer.1} parent=1 // pred_check
      _
    $region35: #{encoder_layer.1} parent=1 // pred_check_branch
      %39 = sbr.rel (0) target = $region37
    $region36: #{encoder_layer.1} parent=1 // pred_region
      _
    $region37: #{encoder_layer.1} parent=1 // pred_fallthru
      _
    // Predicated region
    $region38: #{encoder_layer.1} parent=1 // pred_check
      _
    $region39: #{encoder_layer.1} parent=1 // pred_check_branch
      %41 = sbr.rel (0) target = $region41
    $region40: #{encoder_layer.1} parent=1 // pred_region
      _
    $region41: #{encoder_layer.1} parent=1 // pred_fallthru
      _
    // Predicated region
    $region42: #{encoder_layer.1} parent=1 // pred_check
      _
    $region43: #{encoder_layer.1} parent=1 // pred_check_branch
      %43 = sbr.rel (0) target = $region45
    $region44: #{encoder_layer.1} parent=1 // pred_region
      _
    $region45: #{encoder_layer.1} parent=1 // pred_fallthru
      _
    // Predicated region
    $region46: #{encoder_layer.1} parent=1 // pred_check
      _
    $region47: #{encoder_layer.1} parent=1 // pred_check_branch
      %45 = sbr.rel (0) target = $region49
    $region48: #{encoder_layer.1} parent=1 // pred_region
      _
    $region49: #{encoder_layer.1} parent=1 // pred_fallthru
      _
    // Predicated region
    $region50: #{encoder_layer.1} parent=1 // pred_check
      _
    $region51: #{encoder_layer.1} parent=1 // pred_check_branch
      %47 = sbr.rel (0) target = $region53
    $region52: #{encoder_layer.1} parent=1 // pred_region
      _
    $region53: #{encoder_layer.1} parent=1 // pred_fallthru
      _
    // Predicated region
    $region54: #{encoder_layer.1} parent=1 // pred_check
      _
    $region55: #{encoder_layer.1} parent=1 // pred_check_branch
      %49 = sbr.rel (0) target = $region57
    $region56: #{encoder_layer.1} parent=1 // pred_region
      _
    $region57: #{encoder_layer.1} parent=1 // pred_fallthru
      _
    // Predicated region
    $region58: #{encoder_layer.1} parent=1 // pred_check
      _
    $region59: #{encoder_layer.1} parent=1 // pred_check_branch
      %51 = sbr.rel (0) target = $region61
    $region60: #{encoder_layer.1} parent=1 // pred_region
      _
    $region61: #{encoder_layer.1} parent=1 // pred_fallthru
      _
    // Predicated region
    $region62: #{encoder_layer.1} parent=1 // pred_check
      _
    $region63: #{encoder_layer.1} parent=1 // pred_check_branch
      %53 = sbr.rel (0) target = $region65
    $region64: #{encoder_layer.1} parent=1 // pred_region
      _
    $region65: #{encoder_layer.1} parent=1 // pred_fallthru
      _
    %v55 = vld [vmem:[%s0] sm:$0xff]
    %v56 = vld [vmem:[%s0 + $0x8] sm:$0xff]
    %v57 = vpack.c.bf16 %v56, %v55
    %v58 = vld [vmem:[%s4] sm:$0xf]
    %v59 = vld [vmem:[%s4 + $0x4] sm:$0xf]
    %v60 = vld [vmem:[%s4 + $0x8] sm:$0xf]
    %v61 = vld [vmem:[%s4 + $0xc] sm:$0xf]
    %v62 = vld [vmem:[%s5] sm:$0x1]
    %v64 = vlaneseq
    %v65 = vshrl.u32 %v64, 7
    %v66 = vsub.s32 0, %v65
    %v67 = vrot.slane %v62, %v66
    %v73 = vunpack.c.l.b16 %v58
    %v74 = vunpack.c.l.b16 %v59
    %v75 = vunpack.c.l.b16 %v60
    %v76 = vunpack.c.l.b16 %v61
    %v77 = vpack.c.b16 %v74, %v73
    %v78 = vpack.c.b16 %v76, %v75
    %vm81 = vcmask 261120
    %v83 = vsel %vm81, %v57, 0
    %85 = vmatprep.subr.bf16.mxu0 0
    %86 = vmatpush1.bf16.msra.mxu0 %v77
    %87 = vmatprep.subr.bf16.mxu0 0
    %88 = vmatpush1.bf16.msra.mxu0 %v78
    %89 = vmatprep.subr.bf16.mxu0 0
    %90 = vmatpush1.bf16.msra.mxu0 0
    %91 = vmatprep.subr.bf16.mxu0 0
    %92 = vmatpush1.bf16.msra.mxu0 0
    %93 = vmatprep.subr.bf16.mxu0 0
    %94 = vmatpush1.bf16.msra.mxu0 0
    %95 = vmatprep.subr.bf16.mxu0 0
    %96 = vmatpush1.bf16.msra.mxu0 0
    %97 = vmatprep.subr.bf16.mxu0 0
    %98 = vmatpush1.bf16.msra.mxu0 0
    %99 = vmatprep.subr.bf16.mxu0 0
    %100 = vmatpush1.bf16.msra.mxu0 0
    %101 = vmatprep.subr.bf16.mxu0 0
    %102 = vmatpush1.bf16.msra.mxu0 0
    %103 = vmatprep.subr.bf16.mxu0 0
    %104 = vmatpush1.bf16.msra.mxu0 0
    %105 = vmatprep.subr.bf16.mxu0 0
    %106 = vmatpush1.bf16.msra.mxu0 0
    %107 = vmatprep.subr.bf16.mxu0 0
    %108 = vmatpush1.bf16.msra.mxu0 0
    %109 = vmatprep.subr.bf16.mxu0 0
    %110 = vmatpush1.bf16.msra.mxu0 0
    %111 = vmatprep.subr.bf16.mxu0 0
    %112 = vmatpush1.bf16.msra.mxu0 0
    %113 = vmatprep.subr.bf16.mxu0 0
    %114 = vmatpush1.bf16.msra.mxu0 0
    %115 = vmatprep.subr.bf16.mxu0 0
    %116 = vmatpush1.bf16.msra.mxu0 0
    %117 = vmatprep.mubr.bf16.mxu0 0
    %118 = vmatmul.mubr.bf16.gmra.mrb[0].mxu0 %v83
    %v119 = vpop.f32.mrb[0].mxu0
    %v120 = vadd.f32 %v67, %v119
    %v121 = vpop.f32.mrb[0].mxu0
    %v122 = vpop.f32.mrb[0].mxu0
    %v123 = vadd.f32 %v67, %v122
    %v124 = vpop.f32.mrb[0].mxu0
    %125 = vdwg.mxu0
    %v126 = vld [vmem:[%s2] sm:$0x1]
    %v127 = vld [vmem:[%s2 + $0x1] sm:$0x1]
    %v128 = vld [vmem:[%s2 + $0x2] sm:$0x1]
    %v129 = vld [vmem:[%s2 + $0x3] sm:$0x1]
    %v134 = vlaneseq
    %v135 = vshrl.u32 %v134, 7
    %v136 = vsub.s32 0, %v135
    %v137 = vrot.slane %v126, %v136
    %v138 = vlaneseq
    %v139 = vshrl.u32 %v138, 7
    %v140 = vsub.s32 0, %v139
    %v141 = vrot.slane %v127, %v140
    %v142 = vlaneseq
    %v143 = vshrl.u32 %v142, 7
    %v144 = vsub.s32 0, %v143
    %v145 = vrot.slane %v128, %v144
    %v146 = vlaneseq
    %v147 = vshrl.u32 %v146, 7
    %v148 = vsub.s32 0, %v147
    %v149 = vrot.slane %v129, %v148
    %v154 = vmul.f32 %v120, %v137
    %v155 = vmul.f32 %v123, %v137
    %v156 = vmul.f32 %v120, %v141
    %v157 = vmul.f32 %v123, %v141
    %v158 = vmul.f32 %v120, %v145
    %v159 = vmul.f32 %v123, %v145
    %v160 = vmul.f32 %v120, %v149
    %v161 = vmul.f32 %v123, %v149
    %v162 = vpack.c.bf16 %v155, %v154
    %v163 = vpack.c.bf16 %v157, %v156
    %v164 = vpack.c.bf16 %v159, %v158
    %v165 = vpack.c.bf16 %v161, %v160
    %v166 = vpack.c.bf16 %v123, %v120
    %v167 = vld [vmem:[%s1] sm:$0xff]
    %v168 = vld [vmem:[%s1 + $0x8] sm:$0xff]
    %v169 = vld [vmem:[%s1 + $0x10] sm:$0xff]
    %v170 = vld [vmem:[%s1 + $0x18] sm:$0xff]
    %v171 = vld [vmem:[%s1 + $0x20] sm:$0xff]
    %v172 = vld [vmem:[%s1 + $0x28] sm:$0xff]
    %v173 = vld [vmem:[%s1 + $0x30] sm:$0xff]
    %v174 = vld [vmem:[%s1 + $0x38] sm:$0xff]
    %176 = vrot.lane.b32.xlu0 %v166, 96
    %v177 = vpop.permute.xlu0 %176
    %v179 = vsel %vm81, %v162, 0
    %v182 = vsel %vm81, %v163, 0
    %v185 = vsel %vm81, %v164, 0
    %v188 = vsel %vm81, %v165, 0
    %v191 = vsel %vm81, %v177, 0
    %193 = vmatprep.subr.bf16.mxu0 0
    %194 = vmatpush1.bf16.xpose.msra.mxu0 %v191
    %195 = vmatprep.subr.bf16.mxu0 0
    %196 = vmatpush1.bf16.xpose.msra.mxu0 0
    %197 = vmatprep.subr.bf16.mxu0 0
    %198 = vmatpush1.bf16.xpose.msra.mxu0 0
    %199 = vmatprep.subr.bf16.mxu0 0
    %200 = vmatpush1.bf16.xpose.msra.mxu0 0
    %201 = vmatprep.subr.bf16.mxu0 0
    %202 = vmatpush1.bf16.xpose.msra.mxu0 0
    %203 = vmatprep.subr.bf16.mxu0 0
    %204 = vmatpush1.bf16.xpose.msra.mxu0 0
    %205 = vmatprep.subr.bf16.mxu0 0
    %206 = vmatpush1.bf16.xpose.msra.mxu0 0
    %207 = vmatprep.subr.bf16.mxu0 0
    %208 = vmatpush1.bf16.xpose.msra.mxu0 0
    %209 = vmatprep.subr.bf16.mxu0 0
    %210 = vmatpush1.bf16.xpose.msra.mxu0 0
    %211 = vmatprep.subr.bf16.mxu0 0
    %212 = vmatpush1.bf16.xpose.msra.mxu0 0
    %213 = vmatprep.subr.bf16.mxu0 0
    %214 = vmatpush1.bf16.xpose.msra.mxu0 0
    %215 = vmatprep.subr.bf16.mxu0 0
    %216 = vmatpush1.bf16.xpose.msra.mxu0 0
    %217 = vmatprep.subr.bf16.mxu0 0
    %218 = vmatpush1.bf16.xpose.msra.mxu0 0
    %219 = vmatprep.subr.bf16.mxu0 0
    %220 = vmatpush1.bf16.xpose.msra.mxu0 0
    %221 = vmatprep.subr.bf16.mxu0 0
    %222 = vmatpush1.bf16.xpose.msra.mxu0 0
    %223 = vmatprep.subr.bf16.mxu0 0
    %224 = vmatpush1.bf16.xpose.msra.mxu0 0
    %225 = vmatprep.mubr.bf16.mxu0 0
    %226 = vmatmul.mubr.bf16.gmra.mrb[0].mxu0 %v179
    %v227 = vpop.f32.mrb[0].mxu0
    %v228 = vadd.f32 %v167, %v227
    %v229 = vpop.f32.mrb[0].mxu0
    %v230 = vpop.f32.mrb[0].mxu0
    %v231 = vadd.f32 %v168, %v230
    %v232 = vpop.f32.mrb[0].mxu0
    %233 = vmatprep.mubr.bf16.mxu0 0
    %234 = vmatmul.mubr.bf16.gmra.mrb[0].mxu0 %v182
    %v235 = vpop.f32.mrb[0].mxu0
    %v236 = vadd.f32 %v169, %v235
    %v237 = vpop.f32.mrb[0].mxu0
    %v238 = vpop.f32.mrb[0].mxu0
    %v239 = vadd.f32 %v170, %v238
    %v240 = vpop.f32.mrb[0].mxu0
    %241 = vmatprep.mubr.bf16.mxu0 0
    %242 = vmatmul.mubr.bf16.gmra.mrb[0].mxu0 %v185
    %v243 = vpop.f32.mrb[0].mxu0
    %v244 = vadd.f32 %v171, %v243
    %v245 = vpop.f32.mrb[0].mxu0
    %v246 = vpop.f32.mrb[0].mxu0
    %v247 = vadd.f32 %v172, %v246
    %v248 = vpop.f32.mrb[0].mxu0
    %249 = vmatprep.mubr.bf16.mxu0 0
    %250 = vmatmul.mubr.bf16.gmra.mrb[0].mxu0 %v188
    %v251 = vpop.f32.mrb[0].mxu0
    %v252 = vadd.f32 %v173, %v251
    %v253 = vpop.f32.mrb[0].mxu0
    %v254 = vpop.f32.mrb[0].mxu0
    %v255 = vadd.f32 %v174, %v254
    %v256 = vpop.f32.mrb[0].mxu0
    %257 = vdwg.mxu0
    %vm258 = vcmask 130048
    %v259 = vsel %vm258, %v228, -inf
    %260 = vmax.xlane.f32.xlu0 %v259
    %v261 = vpop.xlane.xlu0 %260
    %v262 = vsel %vm258, %v231, -inf
    %263 = vmax.xlane.f32.xlu0 %v262
    %v264 = vpop.xlane.xlu0 %263
    %v265 = vsel %vm258, %v236, -inf
    %266 = vmax.xlane.f32.xlu0 %v265
    %v267 = vpop.xlane.xlu0 %266
    %v268 = vsel %vm258, %v239, -inf
    %269 = vmax.xlane.f32.xlu0 %v268
    %v270 = vpop.xlane.xlu0 %269
    %v271 = vsel %vm258, %v244, -inf
    %272 = vmax.xlane.f32.xlu0 %v271
    %v273 = vpop.xlane.xlu0 %272
    %v274 = vsel %vm258, %v247, -inf
    %275 = vmax.xlane.f32.xlu0 %v274
    %v276 = vpop.xlane.xlu0 %275
    %v277 = vsel %vm258, %v252, -inf
    %278 = vmax.xlane.f32.xlu0 %v277
    %v279 = vpop.xlane.xlu0 %278
    %v280 = vsel %vm258, %v255, -inf
    %281 = vmax.xlane.f32.xlu0 %v280
    %v282 = vpop.xlane.xlu0 %281
    %v283 = vsub.f32 %v228, %v261
    %v284 = vsub.f32 %v231, %v264
    %v285 = vsub.f32 %v236, %v267
    %v286 = vsub.f32 %v239, %v270
    %v287 = vsub.f32 %v244, %v273
    %v288 = vsub.f32 %v247, %v276
    %v289 = vsub.f32 %v252, %v279
    %v290 = vsub.f32 %v255, %v282
    %v291 = vmul.f32 %v283, 1.442695
    %v292 = vpow.pop %v291
    %v293 = vmul.f32 %v284, 1.442695
    %v294 = vpow.pop %v293
    %v295 = vmul.f32 %v285, 1.442695
    %v296 = vpow.pop %v295
    %v297 = vmul.f32 %v286, 1.442695
    %v298 = vpow.pop %v297
    %v299 = vmul.f32 %v287, 1.442695
    %v300 = vpow.pop %v299
    %v301 = vmul.f32 %v288, 1.442695
    %v302 = vpow.pop %v301
    %v303 = vmul.f32 %v289, 1.442695
    %v304 = vpow.pop %v303
    %v305 = vmul.f32 %v290, 1.442695
    %v306 = vpow.pop %v305
    %v307 = vsel %vm258, %v292, 0.0
    %308 = vadd.xlane.f32.xlu0 %v307
    %v309 = vpop.xlane.xlu0 %308
    %v310 = vsel %vm258, %v294, 0.0
    %311 = vadd.xlane.f32.xlu0 %v310
    %v312 = vpop.xlane.xlu0 %311
    %v313 = vsel %vm258, %v296, 0.0
    %314 = vadd.xlane.f32.xlu0 %v313
    %v315 = vpop.xlane.xlu0 %314
    %v316 = vsel %vm258, %v298, 0.0
    %317 = vadd.xlane.f32.xlu0 %v316
    %v318 = vpop.xlane.xlu0 %317
    %v319 = vsel %vm258, %v300, 0.0
    %320 = vadd.xlane.f32.xlu0 %v319
    %v321 = vpop.xlane.xlu0 %320
    %v322 = vsel %vm258, %v302, 0.0
    %323 = vadd.xlane.f32.xlu0 %v322
    %v324 = vpop.xlane.xlu0 %323
    %v325 = vsel %vm258, %v304, 0.0
    %326 = vadd.xlane.f32.xlu0 %v325
    %v327 = vpop.xlane.xlu0 %326
    %v328 = vsel %vm258, %v306, 0.0
    %329 = vadd.xlane.f32.xlu0 %v328
    %v330 = vpop.xlane.xlu0 %329
    %v331 = vrcp.pop %v309
    %v332 = vrcp.pop %v312
    %v333 = vrcp.pop %v315
    %v334 = vrcp.pop %v318
    %v335 = vrcp.pop %v321
    %v336 = vrcp.pop %v324
    %v337 = vrcp.pop %v327
    %v338 = vrcp.pop %v330
    %v339 = vmul.f32 %v292, %v331
    %v340 = vmul.f32 %v294, %v332
    %v341 = vmul.f32 %v296, %v333
    %v342 = vmul.f32 %v298, %v334
    %v343 = vmul.f32 %v300, %v335
    %v344 = vmul.f32 %v302, %v336
    %v345 = vmul.f32 %v304, %v337
    %v346 = vmul.f32 %v306, %v338
    %v347 = vpack.c.bf16 %v340, %v339
    %v348 = vpack.c.bf16 %v342, %v341
    %v349 = vpack.c.bf16 %v344, %v343
    %v350 = vpack.c.bf16 %v346, %v345
    %351 = vrot.lane.b32.xlu0 %v166, 64
    %v352 = vpop.permute.xlu0 %351
    %v355 = vsel %vm258, %v347, 0
    %v358 = vsel %vm258, %v348, 0
    %v361 = vsel %vm258, %v349, 0
    %v364 = vsel %vm258, %v350, 0
    %366 = vmatprep.subr.bf16.mxu0 0
    %367 = vmatpush1.bf16.msra.mxu0 %v352
    %368 = vmatprep.subr.bf16.mxu0 0
    %369 = vmatpush1.bf16.msra.mxu0 0
    %370 = vmatprep.subr.bf16.mxu0 0
    %371 = vmatpush1.bf16.msra.mxu0 0
    %372 = vmatprep.subr.bf16.mxu0 0
    %373 = vmatpush1.bf16.msra.mxu0 0
    %374 = vmatprep.subr.bf16.mxu0 0
    %375 = vmatpush1.bf16.msra.mxu0 0
    %376 = vmatprep.subr.bf16.mxu0 0
    %377 = vmatpush1.bf16.msra.mxu0 0
    %378 = vmatprep.subr.bf16.mxu0 0
    %379 = vmatpush1.bf16.msra.mxu0 0
    %380 = vmatprep.subr.bf16.mxu0 0
    %381 = vmatpush1.bf16.msra.mxu0 0
    %382 = vmatprep.subr.bf16.mxu0 0
    %383 = vmatpush1.bf16.msra.mxu0 0
    %384 = vmatprep.subr.bf16.mxu0 0
    %385 = vmatpush1.bf16.msra.mxu0 0
    %386 = vmatprep.subr.bf16.mxu0 0
    %387 = vmatpush1.bf16.msra.mxu0 0
    %388 = vmatprep.subr.bf16.mxu0 0
    %389 = vmatpush1.bf16.msra.mxu0 0
    %390 = vmatprep.subr.bf16.mxu0 0
    %391 = vmatpush1.bf16.msra.mxu0 0
    %392 = vmatprep.subr.bf16.mxu0 0
    %393 = vmatpush1.bf16.msra.mxu0 0
    %394 = vmatprep.subr.bf16.mxu0 0
    %395 = vmatpush1.bf16.msra.mxu0 0
    %396 = vmatprep.subr.bf16.mxu0 0
    %397 = vmatpush1.bf16.msra.mxu0 0
    %398 = vmatprep.mubr.bf16.mxu0 0
    %399 = vmatmul.mubr.bf16.gmra.mrb[0].mxu0 %v355
    %v400 = vpop.f32.mrb[0].mxu0
    %v401 = vadd.f32 0.0, %v400
    %v402 = vpop.f32.mrb[0].mxu0
    %v403 = vpop.f32.mrb[0].mxu0
    %v404 = vadd.f32 0.0, %v403
    %v405 = vpop.f32.mrb[0].mxu0
    %406 = vmatprep.mubr.bf16.mxu0 0
    %407 = vmatmul.mubr.bf16.gmra.mrb[0].mxu0 %v358
    %v408 = vpop.f32.mrb[0].mxu0
    %v409 = vadd.f32 0.0, %v408
    %v410 = vpop.f32.mrb[0].mxu0
    %v411 = vpop.f32.mrb[0].mxu0
    %v412 = vadd.f32 0.0, %v411
    %v413 = vpop.f32.mrb[0].mxu0
    %414 = vmatprep.mubr.bf16.mxu0 0
    %415 = vmatmul.mubr.bf16.gmra.mrb[0].mxu0 %v361
    %v416 = vpop.f32.mrb[0].mxu0
    %v417 = vadd.f32 0.0, %v416
    %v418 = vpop.f32.mrb[0].mxu0
    %v419 = vpop.f32.mrb[0].mxu0
    %v420 = vadd.f32 0.0, %v419
    %v421 = vpop.f32.mrb[0].mxu0
    %422 = vmatprep.mubr.bf16.mxu0 0
    %423 = vmatmul.mubr.bf16.gmra.mrb[0].mxu0 %v364
    %v424 = vpop.f32.mrb[0].mxu0
    %v425 = vadd.f32 0.0, %v424
    %v426 = vpop.f32.mrb[0].mxu0
    %v427 = vpop.f32.mrb[0].mxu0
    %v428 = vadd.f32 0.0, %v427
    %v429 = vpop.f32.mrb[0].mxu0
    %430 = vdwg.mxu0
    %v431 = vld [vmem:[%s3] sm:$0x1]
    %v432 = vld [vmem:[%s3 + $0x1] sm:$0x1]
    %v433 = vld [vmem:[%s3 + $0x2] sm:$0x1]
    %v434 = vld [vmem:[%s3 + $0x3] sm:$0x1]
    %v439 = vlaneseq
    %v440 = vshrl.u32 %v439, 7
    %v441 = vsub.s32 0, %v440
    %v442 = vrot.slane %v431, %v441
    %v443 = vlaneseq
    %v444 = vshrl.u32 %v443, 7
    %v445 = vsub.s32 0, %v444
    %v446 = vrot.slane %v432, %v445
    %v447 = vlaneseq
    %v448 = vshrl.u32 %v447, 7
    %v449 = vsub.s32 0, %v448
    %v450 = vrot.slane %v433, %v449
    %v451 = vlaneseq
    %v452 = vshrl.u32 %v451, 7
    %v453 = vsub.s32 0, %v452
    %v454 = vrot.slane %v434, %v453
    %v459 = vmul.f32 %v401, %v442
    %v460 = vmul.f32 %v404, %v442
    %v461 = vmul.f32 %v409, %v446
    %v462 = vmul.f32 %v412, %v446
    %v463 = vmul.f32 %v417, %v450
    %v464 = vmul.f32 %v420, %v450
    %v465 = vmul.f32 %v425, %v454
    %v466 = vmul.f32 %v428, %v454
    %v467 = vsel %vm81, %v459, 0.0
    %v468 = vsel %vm81, %v461, 0.0
    %v469 = vadd.f32 %v467, %v468
    %v470 = vsel %vm81, %v463, 0.0
    %v471 = vadd.f32 %v469, %v470
    %v472 = vsel %vm81, %v465, 0.0
    %v473 = vadd.f32 %v471, %v472
    %v474 = vsel %vm81, %v460, 0.0
    %v475 = vsel %vm81, %v462, 0.0
    %v476 = vadd.f32 %v474, %v475
    %v477 = vsel %vm81, %v464, 0.0
    %v478 = vadd.f32 %v476, %v477
    %v479 = vsel %vm81, %v466, 0.0
    %v480 = vadd.f32 %v478, %v479
    %v481 = vpack.c.bf16 %v480, %v473
    %v482 = vld [vmem:[%s6] sm:$0xf]
    %v483 = vld [vmem:[%s6 + $0x4] sm:$0xf]
    %v484 = vld [vmem:[%s6 + $0x8] sm:$0xf]
    %v485 = vld [vmem:[%s6 + $0xc] sm:$0xf]
    %v486 = vld [vmem:[%s7] sm:$0x1]
    %v488 = vlaneseq
    %v489 = vshrl.u32 %v488, 7
    %v490 = vsub.s32 0, %v489
    %v491 = vrot.slane %v486, %v490
    %v497 = vunpack.c.l.b16 %v482
    %v498 = vunpack.c.l.b16 %v483
    %v499 = vunpack.c.l.b16 %v484
    %v500 = vunpack.c.l.b16 %v485
    %v501 = vpack.c.b16 %v498, %v497
    %v502 = vpack.c.b16 %v500, %v499
    %v506 = vsel %vm81, %v481, 0
    %508 = vmatprep.subr.bf16.mxu0 0
    %509 = vmatpush1.bf16.msra.mxu0 %v501
    %510 = vmatprep.subr.bf16.mxu0 0
    %511 = vmatpush1.bf16.msra.mxu0 %v502
    %512 = vmatprep.subr.bf16.mxu0 0
    %513 = vmatpush1.bf16.msra.mxu0 0
    %514 = vmatprep.subr.bf16.mxu0 0
    %515 = vmatpush1.bf16.msra.mxu0 0
    %516 = vmatprep.subr.bf16.mxu0 0
    %517 = vmatpush1.bf16.msra.mxu0 0
    %518 = vmatprep.subr.bf16.mxu0 0
    %519 = vmatpush1.bf16.msra.mxu0 0
    %520 = vmatprep.subr.bf16.mxu0 0
    %521 = vmatpush1.bf16.msra.mxu0 0
    %522 = vmatprep.subr.bf16.mxu0 0
    %523 = vmatpush1.bf16.msra.mxu0 0
    %524 = vmatprep.subr.bf16.mxu0 0
    %525 = vmatpush1.bf16.msra.mxu0 0
    %526 = vmatprep.subr.bf16.mxu0 0
    %527 = vmatpush1.bf16.msra.mxu0 0
    %528 = vmatprep.subr.bf16.mxu0 0
    %529 = vmatpush1.bf16.msra.mxu0 0
    %530 = vmatprep.subr.bf16.mxu0 0
    %531 = vmatpush1.bf16.msra.mxu0 0
    %532 = vmatprep.subr.bf16.mxu0 0
    %533 = vmatpush1.bf16.msra.mxu0 0
    %534 = vmatprep.subr.bf16.mxu0 0
    %535 = vmatpush1.bf16.msra.mxu0 0
    %536 = vmatprep.subr.bf16.mxu0 0
    %537 = vmatpush1.bf16.msra.mxu0 0
    %538 = vmatprep.subr.bf16.mxu0 0
    %539 = vmatpush1.bf16.msra.mxu0 0
    %540 = vmatprep.mubr.bf16.mxu0 0
    %541 = vmatmul.mubr.bf16.gmra.mrb[0].mxu0 %v506
    %v542 = vpop.f32.mrb[0].mxu0
    %v543 = vadd.f32 %v491, %v542
    %v544 = vpop.f32.mrb[0].mxu0
    %v545 = vpop.f32.mrb[0].mxu0
    %v546 = vadd.f32 %v491, %v545
    %v547 = vpop.f32.mrb[0].mxu0
    %548 = vdwg.mxu0
    %v549 = vadd.f32 %v543, %v55
    %v550 = vadd.f32 %v546, %v56
    %v551 = vsel %vm81, %v549, 0.0
    %552 = vadd.xlane.f32.xlu0 %v551
    %v553 = vpop.xlane.xlu0 %552
    %v554 = vsel %vm81, %v550, 0.0
    %555 = vadd.xlane.f32.xlu0 %v554
    %v556 = vpop.xlane.xlu0 %555
    %v557 = vrcp.pop 32.0
    %v558 = vmul.f32 %v553, %v557
    %v559 = vmul.f32 %v556, %v557
    %v560 = vsub.f32 %v549, %v558
    %v561 = vsub.f32 %v550, %v559
    %v562 = vmul.f32 %v560, %v560
    %v563 = vmul.f32 %v561, %v561
    %v564 = vsel %vm81, %v562, 0.0
    %565 = vadd.xlane.f32.xlu0 %v564
    %v566 = vpop.xlane.xlu0 %565
    %v567 = vsel %vm81, %v563, 0.0
    %568 = vadd.xlane.f32.xlu0 %v567
    %v569 = vpop.xlane.xlu0 %568
    %v570 = vmul.f32 %v566, %v557
    %v571 = vmul.f32 %v569, %v557
    %v572 = vadd.f32 %v570, 1e-05
    %v573 = vadd.f32 %v571, 1e-05
    %v574 = vrsqrt.pop %v572
    %v575 = vrsqrt.pop %v573
    %v576 = vmul.f32 %v560, %v574
    %v577 = vmul.f32 %v561, %v575
    %v578 = vld [vmem:[%s8] sm:$0x1]
    %v580 = vlaneseq
    %v581 = vshrl.u32 %v580, 7
    %v582 = vsub.s32 0, %v581
    %v583 = vrot.slane %v578, %v582
    %v585 = vmul.f32 %v576, %v583
    %v586 = vmul.f32 %v577, %v583
    %v587 = vld [vmem:[%s9] sm:$0x1]
    %v589 = vlaneseq
    %v590 = vshrl.u32 %v589, 7
    %v591 = vsub.s32 0, %v590
    %v592 = vrot.slane %v587, %v591
    %v594 = vadd.f32 %v585, %v592
    %v595 = vadd.f32 %v586, %v592
    %v596 = vpack.c.bf16 %v595, %v594
    %v597 = vld [vmem:[%s10] sm:$0xf]
    %v598 = vld [vmem:[%s10 + $0x4] sm:$0xf]
    %v599 = vld [vmem:[%s10 + $0x8] sm:$0xf]
    %v600 = vld [vmem:[%s10 + $0xc] sm:$0xf]
    %v601 = vld [vmem:[%s11] sm:$0x1]
    %v603 = vlaneseq
    %v604 = vshrl.u32 %v603, 7
    %v605 = vsub.s32 0, %v604
    %v606 = vrot.slane %v601, %v605
    %v612 = vunpack.c.l.b16 %v597
    %v613 = vunpack.c.l.b16 %v598
    %v614 = vunpack.c.l.b16 %v599
    %v615 = vunpack.c.l.b16 %v600
    %v616 = vpack.c.b16 %v613, %v612
    %v617 = vpack.c.b16 %v615, %v614
    %v621 = vsel %vm81, %v596, 0
    %623 = vmatprep.subr.bf16.mxu0 0
    %624 = vmatpush1.bf16.msra.mxu0 %v616
    %625 = vmatprep.subr.bf16.mxu0 0
    %626 = vmatpush1.bf16.msra.mxu0 %v617
    %627 = vmatprep.subr.bf16.mxu0 0
    %628 = vmatpush1.bf16.msra.mxu0 0
    %629 = vmatprep.subr.bf16.mxu0 0
    %630 = vmatpush1.bf16.msra.mxu0 0
    %631 = vmatprep.subr.bf16.mxu0 0
    %632 = vmatpush1.bf16.msra.mxu0 0
    %633 = vmatprep.subr.bf16.mxu0 0
    %634 = vmatpush1.bf16.msra.mxu0 0
    %635 = vmatprep.subr.bf16.mxu0 0
    %636 = vmatpush1.bf16.msra.mxu0 0
    %637 = vmatprep.subr.bf16.mxu0 0
    %638 = vmatpush1.bf16.msra.mxu0 0
    %639 = vmatprep.subr.bf16.mxu0 0
    %640 = vmatpush1.bf16.msra.mxu0 0
    %641 = vmatprep.subr.bf16.mxu0 0
    %642 = vmatpush1.bf16.msra.mxu0 0
    %643 = vmatprep.subr.bf16.mxu0 0
    %644 = vmatpush1.bf16.msra.mxu0 0
    %645 = vmatprep.subr.bf16.mxu0 0
    %646 = vmatpush1.bf16.msra.mxu0 0
    %647 = vmatprep.subr.bf16.mxu0 0
    %648 = vmatpush1.bf16.msra.mxu0 0
    %649 = vmatprep.subr.bf16.mxu0 0
    %650 = vmatpush1.bf16.msra.mxu0 0
    %651 = vmatprep.subr.bf16.mxu0 0
    %652 = vmatpush1.bf16.msra.mxu0 0
    %653 = vmatprep.subr.bf16.mxu0 0
    %654 = vmatpush1.bf16.msra.mxu0 0
    %655 = vmatprep.mubr.bf16.mxu0 0
    %656 = vmatmul.mubr.bf16.gmra.mrb[0].mxu0 %v621
    %v657 = vpop.f32.mrb[0].mxu0
    %v658 = vadd.f32 %v606, %v657
    %v659 = vpop.f32.mrb[0].mxu0
    %v660 = vpop.f32.mrb[0].mxu0
    %v661 = vadd.f32 %v606, %v660
    %v662 = vpop.f32.mrb[0].mxu0
    %663 = vdwg.mxu0
    %v664 = vmax.f32 %v658, 0.0
    %v665 = vmax.f32 %v661, 0.0
    %v666 = vpack.c.bf16 %v665, %v664
    %v667 = vld [vmem:[%s12] sm:$0xf]
    %v668 = vld [vmem:[%s12 + $0x4] sm:$0xf]
    %v669 = vld [vmem:[%s12 + $0x8] sm:$0xf]
    %v670 = vld [vmem:[%s12 + $0xc] sm:$0xf]
    %v671 = vld [vmem:[%s12 + $0x10] sm:$0xf]
    %v672 = vld [vmem:[%s12 + $0x14] sm:$0xf]
    %v673 = vld [vmem:[%s12 + $0x18] sm:$0xf]
    %v674 = vld [vmem:[%s12 + $0x1c] sm:$0xf]
    %v675 = vld [vmem:[%s13] sm:$0x1]
    %v677 = vlaneseq
    %v678 = vshrl.u32 %v677, 7
    %v679 = vsub.s32 0, %v678
    %v680 = vrot.slane %v675, %v679
    %v690 = vunpack.c.l.b16 %v667
    %v691 = vunpack.c.l.b16 %v668
    %v692 = vunpack.c.l.b16 %v669
    %v693 = vunpack.c.l.b16 %v670
    %v694 = vunpack.c.l.b16 %v671
    %v695 = vunpack.c.l.b16 %v672
    %v696 = vunpack.c.l.b16 %v673
    %v697 = vunpack.c.l.b16 %v674
    %v698 = vpack.c.b16 %v691, %v690
    %v699 = vpack.c.b16 %v693, %v692
    %v700 = vpack.c.b16 %v695, %v694
    %v701 = vpack.c.b16 %v697, %v696
    %vm706 = vcmask 523264
    %v708 = vsel %vm706, %v666, 0
    %710 = vmatprep.subr.bf16.mxu0 0
    %711 = vmatpush1.bf16.msra.mxu0 %v698
    %712 = vmatprep.subr.bf16.mxu0 0
    %713 = vmatpush1.bf16.msra.mxu0 %v699
    %714 = vmatprep.subr.bf16.mxu0 0
    %715 = vmatpush1.bf16.msra.mxu0 %v700
    %716 = vmatprep.subr.bf16.mxu0 0
    %717 = vmatpush1.bf16.msra.mxu0 %v701
    %718 = vmatprep.subr.bf16.mxu0 0
    %719 = vmatpush1.bf16.msra.mxu0 0
    %720 = vmatprep.subr.bf16.mxu0 0
    %721 = vmatpush1.bf16.msra.mxu0 0
    %722 = vmatprep.subr.bf16.mxu0 0
    %723 = vmatpush1.bf16.msra.mxu0 0
    %724 = vmatprep.subr.bf16.mxu0 0
    %725 = vmatpush1.bf16.msra.mxu0 0
    %726 = vmatprep.subr.bf16.mxu0 0
    %727 = vmatpush1.bf16.msra.mxu0 0
    %728 = vmatprep.subr.bf16.mxu0 0
    %729 = vmatpush1.bf16.msra.mxu0 0
    %730 = vmatprep.subr.bf16.mxu0 0
    %731 = vmatpush1.bf16.msra.mxu0 0
    %732 = vmatprep.subr.bf16.mxu0 0
    %733 = vmatpush1.bf16.msra.mxu0 0
    %734 = vmatprep.subr.bf16.mxu0 0
    %735 = vmatpush1.bf16.msra.mxu0 0
    %736 = vmatprep.subr.bf16.mxu0 0
    %737 = vmatpush1.bf16.msra.mxu0 0
    %738 = vmatprep.subr.bf16.mxu0 0
    %739 = vmatpush1.bf16.msra.mxu0 0
    %740 = vmatprep.subr.bf16.mxu0 0
    %741 = vmatpush1.bf16.msra.mxu0 0
    %742 = vmatprep.mubr.bf16.mxu0 0
    %743 = vmatmul.mubr.bf16.gmra.mrb[0].mxu0 %v708
    %v744 = vpop.f32.mrb[0].mxu0
    %v745 = vadd.f32 %v680, %v744
    %v746 = vpop.f32.mrb[0].mxu0
    %v747 = vpop.f32.mrb[0].mxu0
    %v748 = vadd.f32 %v680, %v747
    %v749 = vpop.f32.mrb[0].mxu0
    %750 = vdwg.mxu0
    %v751 = vadd.f32 %v745, %v594
    %v752 = vadd.f32 %v748, %v595
    %v753 = vsel %vm81, %v751, 0.0
    %754 = vadd.xlane.f32.xlu0 %v753
    %v755 = vpop.xlane.xlu0 %754
    %v756 = vsel %vm81, %v752, 0.0
    %757 = vadd.xlane.f32.xlu0 %v756
    %v758 = vpop.xlane.xlu0 %757
    %v759 = vmul.f32 %v755, %v557
    %v760 = vmul.f32 %v758, %v557
    %v761 = vsub.f32 %v751, %v759
    %v762 = vsub.f32 %v752, %v760
    %v763 = vmul.f32 %v761, %v761
    %v764 = vmul.f32 %v762, %v762
    %v765 = vsel %vm81, %v763, 0.0
    %766 = vadd.xlane.f32.xlu0 %v765
    %v767 = vpop.xlane.xlu0 %766
    %v768 = vsel %vm81, %v764, 0.0
    %769 = vadd.xlane.f32.xlu0 %v768
    %v770 = vpop.xlane.xlu0 %769
    %v771 = vmul.f32 %v767, %v557
    %v772 = vmul.f32 %v770, %v557
    %v773 = vadd.f32 %v771, 1e-05
    %v774 = vadd.f32 %v772, 1e-05
    %v775 = vrsqrt.pop %v773
    %v776 = vrsqrt.pop %v774
    %v777 = vmul.f32 %v761, %v775
    %v778 = vmul.f32 %v762, %v776
    %v779 = vld [vmem:[%s14] sm:$0x1]
    %v781 = vlaneseq
    %v782 = vshrl.u32 %v781, 7
    %v783 = vsub.s32 0, %v782
    %v784 = vrot.slane %v779, %v783
    %v786 = vmul.f32 %v777, %v784
    %v787 = vmul.f32 %v778, %v784
    %v788 = vld [vmem:[%s15] sm:$0x1]
    %v790 = vlaneseq
    %v791 = vshrl.u32 %v790, 7
    %v792 = vsub.s32 0, %v791
    %v793 = vrot.slane %v788, %v792
    %v795 = vadd.f32 %v786, %v793
    %v796 = vadd.f32 %v787, %v793
    %797 = vst.msk [vmem:[#allocation2] sm:$0xff] %vm81, %v795
    %798 = vst.msk [vmem:[#allocation2 + $0x8] sm:$0xff] %vm81, %v796
    // Predicated region
    $region66: #{encoder_layer.1} parent=1 // pred_check
      _
    $region67: #{encoder_layer.1} parent=1 // pred_check_branch
      %800 = sbr.rel (0) target = $region69
    $region68: #{encoder_layer.1} parent=1 // pred_region
      %s802 = ssub.s32 256, 256
      %803 = vsyncadd [#allocation3], %s802
      %s804 = sshll.u32 [#allocation2], 4
      %s805 = int_to_ptr.vmem [resolvable:$true] %s804
      %810 = dma.vmem_to_hbm [thread:$0]  %s805, 256, %s16, [#allocation3], 128, 128, 8
    $region69: #{encoder_layer.1} parent=1 // pred_fallthru
      _
    // Predicated region
    $region70: #{encoder_layer.1} parent=1 // pred_check
      _
    $region71: #{encoder_layer.1} parent=1 // pred_check_branch
      %812 = sbr.rel (0) target = $region73
    $region72: #{encoder_layer.1} parent=1 // pred_region
      %813 = dma.done [#allocation3], 256
    $region73: #{encoder_layer.1} parent=1 // pred_fallthru
      _
    %814 = vsyncpa [#allocation3], 1

</llo_original>
